<compile_context>
chip_gen: v7x
topology: tpu7x:2x2x1
jax: 0.10.0
libtpu: 0.0.40
codegen_flags: <defaults>
</compile_context>

<pallas_src>
import functools

import jax
import jax.numpy as jnp
from jax.experimental import pallas as pl
from jax.experimental.pallas import tpu as pltpu

MARGIN = 1.0
PAIRWISE_EPS = 1e-6              # torch F.pairwise_distance default eps
_FAST_PATH_BYTES = 1 << 20       # ~1 MiB padded working set -> gridless path
_ROW_CAP = 2048                  # >=512-row tiles already hit ~85% of roofline


# ----------------------------------------------------------------------------
# Kernel
# ----------------------------------------------------------------------------
def _triplet_kernel(a_ref, p_ref, n_ref, o_ref, *, margin, n_seg, seg_d,
                    rows_total, tile_rows, ragged):
    """One tile of (packed) rows -> scalar partial hinge-loss sum in SMEM.

    Each row of the (rows, n_seg*seg_d) inputs holds `n_seg` original
    embeddings of length `seg_d` packed along the lane axis (n_seg == 1 for the
    un-packed path).  All math is done in f32.
    """
    a = a_ref[...].astype(jnp.float32)
    p = p_ref[...].astype(jnp.float32)
    n = n_ref[...].astype(jnp.float32)

    # pairwise_distance(x1, x2, 2, eps) = ||x1 - x2 + eps||_2 over the last dim
    dp2 = (a - p + PAIRWISE_EPS) ** 2
    dn2 = (a - n + PAIRWISE_EPS) ** 2

    rows = a.shape[0]
    loss_rows = jnp.zeros((rows, 1), jnp.float32)
    # Segmented lane reduction: static slices + VPU sums (exact f32, no MXU).
    for j in range(n_seg):
        lo = j * seg_d
        sp = jnp.sum(dp2[:, lo:lo + seg_d], axis=-1, keepdims=True)
        sn = jnp.sum(dn2[:, lo:lo + seg_d], axis=-1, keepdims=True)
        loss_rows = loss_rows + jnp.maximum(
            jnp.sqrt(sp) - jnp.sqrt(sn) + margin, 0.0)

    if ragged:
        # Mask padded / out-of-range rows of the last tile.  Packed rows are
        # all-or-nothing valid because packing requires B % n_seg == 0.
        # Keep this a select (not a multiply): OOB rows may hold NaN/Inf.
        row0 = pl.program_id(0) * tile_rows
        ridx = row0 + jax.lax.broadcasted_iota(jnp.int32, loss_rows.shape, 0)
        loss_rows = jnp.where(ridx < rows_total, loss_rows, 0.0)

    o_ref[0] = jnp.sum(loss_rows)


# ----------------------------------------------------------------------------
# Tiling / VMEM planning
# ----------------------------------------------------------------------------
def _vmem_plan():
    """(vmem_limit_bytes, double_buffer_budget_bytes), generation aware."""
    cap = 64 * 1024 * 1024           # conservative fallback (v7x-sized)
    try:
        info = pltpu.get_tpu_info()
        c = int(getattr(info, "vmem_capacity_bytes"))
        if c > 0:
            cap = c
    except Exception:
        pass
    # v5e/v6e: 128 MiB physical -> limit 96 MiB, input budget 48 MiB.
    # v7x:      64 MiB physical -> limit 48 MiB, input budget 24 MiB.
    vmem_limit = min((cap * 3) // 4, 112 * 1024 * 1024)
    return int(vmem_limit), int(vmem_limit // 2)


def _pick_tile_rows(rows, lane_w, itemsize, budget_bytes, cap=_ROW_CAP):
    """Largest balanced row tile whose 3 double-buffered inputs (at their
    lane-PADDED width) plus f32 upcast temporaries fit the VMEM budget."""
    sub = 16 if itemsize < 4 else 8                  # sublane packing multiple
    pad_w = -(-lane_w // 128) * 128                  # lane padding in VMEM
    # 3 inputs x 2 pipeline buffers at native dtype + ~4 f32-sized temporaries
    per_row = pad_w * (3 * 2 * itemsize + 4 * 4)
    t_max = max(budget_bytes // per_row, sub)
    t_max = min(t_max, cap)
    # Balance: even(ish) number of roughly equal tiles so v7x's two
    # TensorCores split the "parallel" grid evenly (no 2048 + sliver).
    n_pairs = -(-rows // (2 * t_max))                # cdiv
    tile = -(-rows // (2 * n_pairs))                 # cdiv
    tile = -(-tile // sub) * sub                     # round up to sublane mult
    return int(max(tile, sub))


# ----------------------------------------------------------------------------
# Wrapper
# ----------------------------------------------------------------------------
def triplet_loss(anchor, positive, negative, *, margin=MARGIN, tile_rows=None,
                 force_tiled=False):
    """Pallas TPU implementation of TripletLoss.forward; returns a scalar."""
    assert anchor.shape == positive.shape == negative.shape
    assert anchor.ndim == 2, "expected (batch, feature) embeddings"
    B, D = anchor.shape
    itemsize = jnp.dtype(anchor.dtype).itemsize

    # --- wrapper-side repack to lane-dense tiles (free reshape) --------------
    a, p, n = anchor, positive, negative
    n_seg, seg_d = 1, D
    if D < 128 and 128 % D == 0 and B % (128 // D) == 0:
        n_seg = 128 // D
        a = anchor.reshape(B // n_seg, n_seg * D)
        p = positive.reshape(B // n_seg, n_seg * D)
        n = negative.reshape(B // n_seg, n_seg * D)
    rows, lane_w = a.shape
    pad_w = -(-lane_w // 128) * 128

    vmem_limit, dbuf_budget = _vmem_plan()
    cost = pl.CostEstimate(
        flops=10 * B * D,
        transcendentals=2 * B,                       # two sqrt per triplet
        bytes_accessed=3 * B * D * itemsize + 64,
    )

    # --- gridless fast path for tiny problems --------------------------------
    padded_bytes = rows * pad_w * (3 * itemsize + 3 * 4)
    if (not force_tiled) and tile_rows is None and padded_bytes <= _FAST_PATH_BYTES:
        kernel = functools.partial(
            _triplet_kernel, margin=float(margin), n_seg=n_seg, seg_d=seg_d,
            rows_total=rows, tile_rows=rows, ragged=False)
        out = pl.pallas_call(
            kernel,
            out_shape=jax.ShapeDtypeStruct((1,), jnp.float32),
            out_specs=pl.BlockSpec(memory_space=pltpu.MemorySpace.SMEM),
            compiler_params=pltpu.CompilerParams(vmem_limit_bytes=vmem_limit),
            cost_estimate=cost,
        )(a, p, n)
        return out[0] / jnp.float32(B)

    # --- tiled path -----------------------------------------------------------
    if tile_rows is None:
        tile_rows = _pick_tile_rows(rows, lane_w, itemsize, dbuf_budget)
    num_tiles = pl.cdiv(rows, tile_rows)
    ragged = (rows % tile_rows) != 0

    kernel = functools.partial(
        _triplet_kernel, margin=float(margin), n_seg=n_seg, seg_d=seg_d,
        rows_total=rows, tile_rows=tile_rows, ragged=ragged)

    partials = pl.pallas_call(
        kernel,
        out_shape=jax.ShapeDtypeStruct((num_tiles,), jnp.float32),
        grid=(num_tiles,),
        in_specs=[
            pl.BlockSpec((tile_rows, lane_w), lambda i: (i, 0)),
            pl.BlockSpec((tile_rows, lane_w), lambda i: (i, 0)),
            pl.BlockSpec((tile_rows, lane_w), lambda i: (i, 0)),
        ],
        # One SMEM scalar per grid step: no masked sub-tile VMEM stores, no
        # per-step writeback DMA, and steps stay fully independent.
        out_specs=pl.BlockSpec((1,), lambda i: (i,),
                               memory_space=pltpu.MemorySpace.SMEM),
        compiler_params=pltpu.CompilerParams(
            dimension_semantics=("parallel",),   # v7x: shard tiles across TCs
            vmem_limit_bytes=vmem_limit,
        ),
        cost_estimate=cost,
    )(a, p, n)

    return jnp.sum(partials) / jnp.float32(B)


# ----------------------------------------------------------------------------
# Reference + self-test
# ----------------------------------------------------------------------------
def _reference(anchor, positive, negative, margin=MARGIN):
    a = anchor.astype(jnp.float32)
    p = positive.astype(jnp.float32)
    n = negative.astype(jnp.float32)
    dp = jnp.sqrt(jnp.sum((a - p + PAIRWISE_EPS) ** 2, axis=-1))
    dn = jnp.sqrt(jnp.sum((a - n + PAIRWISE_EPS) ** 2, axis=-1))
    return jnp.mean(jnp.maximum(dp - dn + margin, 0.0))


if __name__ == "__main__":
    key = jax.random.PRNGKey(0)

    def make_inputs(B, D, dtype, salt):
        k = jax.random.fold_in(key, salt)
        ka, kp, kn = jax.random.split(k, 3)
        a = jax.random.normal(ka, (B, D), dtype=jnp.float32).astype(dtype)
        p = jax.random.normal(kp, (B, D), dtype=jnp.float32).astype(dtype)
        n = jax.random.normal(kn, (B, D), dtype=jnp.float32).astype(dtype)
        return a, p, n

    # 1) Primary small example (B=16, D=32): repacked + gridless fast path.
    a, p, n = make_inputs(16, 32, jnp.float32, salt=1)
    loss = jax.block_until_ready(triplet_loss(a, p, n))
    ref = _reference(a, p, n)
    assert jnp.allclose(loss, ref, rtol=1e-4, atol=1e-5), (loss, ref)

    # 2) Tiled + repacked + ragged last tile (B=100 -> 25 packed rows, tile 8).
    a, p, n = make_inputs(100, 32, jnp.float32, salt=2)
    loss = jax.block_until_ready(
        triplet_loss(a, p, n, tile_rows=8, force_tiled=True))
    ref = _reference(a, p, n)
    assert jnp.allclose(loss, ref, rtol=1e-4, atol=1e-5), (loss, ref)

    # 3) Non-repackable lane width (D=33) + ragged batch, auto tile size.
    a, p, n = make_inputs(10, 33, jnp.float32, salt=3)
    loss = jax.block_until_ready(triplet_loss(a, p, n, force_tiled=True))
    ref = _reference(a, p, n)
    assert jnp.allclose(loss, ref, rtol=1e-4, atol=1e-5), (loss, ref)

    # 4) bf16 inputs through the tiled repacked path.
    a, p, n = make_inputs(64, 32, jnp.bfloat16, salt=4)
    loss = jax.block_until_ready(triplet_loss(a, p, n, force_tiled=True))
    ref = _reference(a, p, n)
    assert jnp.allclose(loss, ref, rtol=1e-4, atol=1e-4), (loss, ref)

    print("KERNEL_OK")
</pallas_src>

<mosaic_0001>
module attributes {stable_mosaic.version = 11 : i64} {
  func.func @_triplet_kernel(%arg0: memref<4x128xf32, #tpu.memory_space<vmem>>, %arg1: memref<4x128xf32, #tpu.memory_space<vmem>>, %arg2: memref<4x128xf32, #tpu.memory_space<vmem>>, %arg3: memref<1xf32, #tpu.memory_space<smem>>) attributes {dimension_semantics = [], scalar_prefetch = 0 : i64, scratch_operands = 0 : i64, tpu.core_type = #tpu.core_type<tc>} {
    %c0 = arith.constant 0 : index
    %c0_0 = arith.constant 0 : index
    %0 = vector.load %arg0[%c0, %c0_0] : memref<4x128xf32, #tpu.memory_space<vmem>>, vector<4x128xf32>
    %c0_1 = arith.constant 0 : index
    %c0_2 = arith.constant 0 : index
    %1 = vector.load %arg1[%c0_1, %c0_2] : memref<4x128xf32, #tpu.memory_space<vmem>>, vector<4x128xf32>
    %c0_3 = arith.constant 0 : index
    %c0_4 = arith.constant 0 : index
    %2 = vector.load %arg2[%c0_3, %c0_4] : memref<4x128xf32, #tpu.memory_space<vmem>>, vector<4x128xf32>
    %3 = arith.subf %0, %1 : vector<4x128xf32>
    %cst = arith.constant 9.99999997E-7 : f32
    %4 = vector.broadcast %cst : f32 to vector<4x128xf32>
    %5 = arith.addf %3, %4 : vector<4x128xf32>
    %6 = arith.mulf %5, %5 : vector<4x128xf32>
    %7 = arith.subf %0, %2 : vector<4x128xf32>
    %cst_5 = arith.constant 9.99999997E-7 : f32
    %8 = vector.broadcast %cst_5 : f32 to vector<4x128xf32>
    %9 = arith.addf %7, %8 : vector<4x128xf32>
    %10 = arith.mulf %9, %9 : vector<4x128xf32>
    %cst_6 = arith.constant 0.000000e+00 : f32
    %11 = vector.broadcast %cst_6 : f32 to vector<4x1xf32>
    %12 = vector.extract_strided_slice %6 {offsets = [0, 0], sizes = [4, 32], strides = [1, 1]} : vector<4x128xf32> to vector<4x32xf32>
    %cst_7 = arith.constant dense<0.000000e+00> : vector<4xf32>
    %13 = vector.multi_reduction <add>, %12, %cst_7 [1] : vector<4x32xf32> to vector<4xf32>
    %14 = vector.shape_cast %13 : vector<4xf32> to vector<4x1xf32>
    %15 = vector.extract_strided_slice %10 {offsets = [0, 0], sizes = [4, 32], strides = [1, 1]} : vector<4x128xf32> to vector<4x32xf32>
    %cst_8 = arith.constant dense<0.000000e+00> : vector<4xf32>
    %16 = vector.multi_reduction <add>, %15, %cst_8 [1] : vector<4x32xf32> to vector<4xf32>
    %17 = vector.shape_cast %16 : vector<4xf32> to vector<4x1xf32>
    %18 = math.sqrt %14 : vector<4x1xf32>
    %19 = math.sqrt %17 : vector<4x1xf32>
    %20 = arith.subf %18, %19 : vector<4x1xf32>
    %cst_9 = arith.constant 1.000000e+00 : f32
    %21 = vector.broadcast %cst_9 : f32 to vector<4x1xf32>
    %22 = arith.addf %20, %21 : vector<4x1xf32>
    %cst_10 = arith.constant 0.000000e+00 : f32
    %23 = vector.broadcast %cst_10 : f32 to vector<4x1xf32>
    %24 = arith.maximumf %22, %23 : vector<4x1xf32>
    %25 = arith.addf %11, %24 : vector<4x1xf32>
    %26 = vector.extract_strided_slice %6 {offsets = [0, 32], sizes = [4, 32], strides = [1, 1]} : vector<4x128xf32> to vector<4x32xf32>
    %cst_11 = arith.constant dense<0.000000e+00> : vector<4xf32>
    %27 = vector.multi_reduction <add>, %26, %cst_11 [1] : vector<4x32xf32> to vector<4xf32>
    %28 = vector.shape_cast %27 : vector<4xf32> to vector<4x1xf32>
    %29 = vector.extract_strided_slice %10 {offsets = [0, 32], sizes = [4, 32], strides = [1, 1]} : vector<4x128xf32> to vector<4x32xf32>
    %cst_12 = arith.constant dense<0.000000e+00> : vector<4xf32>
    %30 = vector.multi_reduction <add>, %29, %cst_12 [1] : vector<4x32xf32> to vector<4xf32>
    %31 = vector.shape_cast %30 : vector<4xf32> to vector<4x1xf32>
    %32 = math.sqrt %28 : vector<4x1xf32>
    %33 = math.sqrt %31 : vector<4x1xf32>
    %34 = arith.subf %32, %33 : vector<4x1xf32>
    %cst_13 = arith.constant 1.000000e+00 : f32
    %35 = vector.broadcast %cst_13 : f32 to vector<4x1xf32>
    %36 = arith.addf %34, %35 : vector<4x1xf32>
    %cst_14 = arith.constant 0.000000e+00 : f32
    %37 = vector.broadcast %cst_14 : f32 to vector<4x1xf32>
    %38 = arith.maximumf %36, %37 : vector<4x1xf32>
    %39 = arith.addf %25, %38 : vector<4x1xf32>
    %40 = vector.extract_strided_slice %6 {offsets = [0, 64], sizes = [4, 32], strides = [1, 1]} : vector<4x128xf32> to vector<4x32xf32>
    %cst_15 = arith.constant dense<0.000000e+00> : vector<4xf32>
    %41 = vector.multi_reduction <add>, %40, %cst_15 [1] : vector<4x32xf32> to vector<4xf32>
    %42 = vector.shape_cast %41 : vector<4xf32> to vector<4x1xf32>
    %43 = vector.extract_strided_slice %10 {offsets = [0, 64], sizes = [4, 32], strides = [1, 1]} : vector<4x128xf32> to vector<4x32xf32>
    %cst_16 = arith.constant dense<0.000000e+00> : vector<4xf32>
    %44 = vector.multi_reduction <add>, %43, %cst_16 [1] : vector<4x32xf32> to vector<4xf32>
    %45 = vector.shape_cast %44 : vector<4xf32> to vector<4x1xf32>
    %46 = math.sqrt %42 : vector<4x1xf32>
    %47 = math.sqrt %45 : vector<4x1xf32>
    %48 = arith.subf %46, %47 : vector<4x1xf32>
    %cst_17 = arith.constant 1.000000e+00 : f32
    %49 = vector.broadcast %cst_17 : f32 to vector<4x1xf32>
    %50 = arith.addf %48, %49 : vector<4x1xf32>
    %cst_18 = arith.constant 0.000000e+00 : f32
    %51 = vector.broadcast %cst_18 : f32 to vector<4x1xf32>
    %52 = arith.maximumf %50, %51 : vector<4x1xf32>
    %53 = arith.addf %39, %52 : vector<4x1xf32>
    %54 = vector.extract_strided_slice %6 {offsets = [0, 96], sizes = [4, 32], strides = [1, 1]} : vector<4x128xf32> to vector<4x32xf32>
    %cst_19 = arith.constant dense<0.000000e+00> : vector<4xf32>
    %55 = vector.multi_reduction <add>, %54, %cst_19 [1] : vector<4x32xf32> to vector<4xf32>
    %56 = vector.shape_cast %55 : vector<4xf32> to vector<4x1xf32>
    %57 = vector.extract_strided_slice %10 {offsets = [0, 96], sizes = [4, 32], strides = [1, 1]} : vector<4x128xf32> to vector<4x32xf32>
    %cst_20 = arith.constant dense<0.000000e+00> : vector<4xf32>
    %58 = vector.multi_reduction <add>, %57, %cst_20 [1] : vector<4x32xf32> to vector<4xf32>
    %59 = vector.shape_cast %58 : vector<4xf32> to vector<4x1xf32>
    %60 = math.sqrt %56 : vector<4x1xf32>
    %61 = math.sqrt %59 : vector<4x1xf32>
    %62 = arith.subf %60, %61 : vector<4x1xf32>
    %cst_21 = arith.constant 1.000000e+00 : f32
    %63 = vector.broadcast %cst_21 : f32 to vector<4x1xf32>
    %64 = arith.addf %62, %63 : vector<4x1xf32>
    %cst_22 = arith.constant 0.000000e+00 : f32
    %65 = vector.broadcast %cst_22 : f32 to vector<4x1xf32>
    %66 = arith.maximumf %64, %65 : vector<4x1xf32>
    %67 = arith.addf %53, %66 : vector<4x1xf32>
    %68 = vector.shape_cast %67 : vector<4x1xf32> to vector<1x4x1xf32>
    %cst_23 = arith.constant dense<0.000000e+00> : vector<1xf32>
    %69 = vector.multi_reduction <add>, %68, %cst_23 [1, 2] : vector<1x4x1xf32> to vector<1xf32>
    %70 = vector.shape_cast %69 : vector<1xf32> to vector<1x1x1xf32>
    %71 = vector.extract %70[0, 0, 0] : f32 from vector<1x1x1xf32>
    %c0_24 = arith.constant 0 : index
    %72 = memref.load %arg3[%c0_24] : memref<1xf32, #tpu.memory_space<smem>>
    memref.store %71, %arg3[%c0_24] : memref<1xf32, #tpu.memory_space<smem>>
    return
  }
}

</mosaic_0001>

<llo_original>
// kernel: tpu_custom_call.1
$region0: #{tpu_custom_call.1}
  #allocation0 [shape = 'u32[]', space=smem, size = 0x4, offset = 0x4, fixed_abs, tag = 'smem constant byte address 0x4 - core index']
  #allocation1 [shape = 'u32[144,128]{1,0:T(1,128)}', space=vmem, size = 0x12000, scoped, tag = 'internal scratch']
  %s0 = inlined_call_operand.hbm [shape: f32[4,128], index: 0, kind: input, shape index: {}]
  %s1 = inlined_call_operand.hbm [shape: f32[4,128], index: 1, kind: input, shape index: {}]
  %s2 = inlined_call_operand.vmem [shape: f32[4,128], index: 2, kind: input, shape index: {}]
  %s3 = inlined_call_operand.hbm [shape: f32[1], index: 3, kind: output, shape index: {}]
  %s4 = sld [smem:[#allocation0]]
  $region30: #{tpu_custom_call.1} parent=0
    _
  %s6 = ssub.s32 1, %s4
  %s7 = scalar_select 0, %s6, %s4
  $region1: #{tpu_custom_call.1} parent=0
    #allocation2 [shape = 'u8[2048]{0}', space=vmem, size = 0x800, scoped, tag = 'input window, operand 0, single buffered']
    #allocation3 [shape = 's32[1]{0}', space=sflag, size = 0x4, scoped, tag = 'scoped memory for tpu_custom_call.1']
    #allocation4 [shape = 's32[1]{0}', space=sflag, size = 0x4, scoped, tag = 'scoped memory for tpu_custom_call.1']
    #allocation5 [shape = 'u8[2048]{0}', space=vmem, size = 0x800, scoped, tag = 'input window, operand 1, single buffered']
    #allocation6 [shape = 's32[1]{0}', space=sflag, size = 0x4, scoped, tag = 'scoped memory for tpu_custom_call.1']
    #allocation7 [shape = 'u8[512]{0}', space=smem, size = 0x200, scoped, tag = 'output window, operand 0, single buffered']
    %8 = vsyncpa [#allocation3], 0
    %9 = vsyncpa [#allocation6], 0
    %10 = vsyncpa [#allocation4], 0
    // Predicated region
    $region2: #{tpu_custom_call.1} parent=1 // pred_check
      _
    $region3: #{tpu_custom_call.1} parent=1 // pred_check_branch
      %12 = sbr.rel (0) target = $region5
    $region4: #{tpu_custom_call.1} parent=1 // pred_region
      %s14 = ssub.s32 64, 64
      %15 = vsyncadd [#allocation3], %s14
      %s17 = sshll.u32 [#allocation2], 4
      %s18 = int_to_ptr.vmem [resolvable:$true] %s17
      %20 = dma.hbm_to_vmem [thread:$0]  %s0, 64, %s18, [#allocation3]
    $region5: #{tpu_custom_call.1} parent=1 // pred_fallthru
      _
    // Predicated region
    $region6: #{tpu_custom_call.1} parent=1 // pred_check
      _
    $region7: #{tpu_custom_call.1} parent=1 // pred_check_branch
      %22 = sbr.rel (0) target = $region9
    $region8: #{tpu_custom_call.1} parent=1 // pred_region
      %s24 = ssub.s32 64, 64
      %25 = vsyncadd [#allocation6], %s24
      %s27 = sshll.u32 [#allocation5], 4
      %s28 = int_to_ptr.vmem [resolvable:$true] %s27
      %30 = dma.hbm_to_vmem [thread:$0]  %s1, 64, %s28, [#allocation6]
    $region9: #{tpu_custom_call.1} parent=1 // pred_fallthru
      _
    // Predicated region
    $region10: #{tpu_custom_call.1} parent=1 // pred_check
      _
    $region11: #{tpu_custom_call.1} parent=1 // pred_check_branch
      %32 = sbr.rel (0) target = $region13
    $region12: #{tpu_custom_call.1} parent=1 // pred_region
      _
    $region13: #{tpu_custom_call.1} parent=1 // pred_fallthru
      _
    // Predicated region
    $region14: #{tpu_custom_call.1} parent=1 // pred_check
      _
    $region15: #{tpu_custom_call.1} parent=1 // pred_check_branch
      %34 = sbr.rel (0) target = $region17
    $region16: #{tpu_custom_call.1} parent=1 // pred_region
      %35 = dma.done [#allocation3], 64
    $region17: #{tpu_custom_call.1} parent=1 // pred_fallthru
      _
    // Predicated region
    $region18: #{tpu_custom_call.1} parent=1 // pred_check
      _
    $region19: #{tpu_custom_call.1} parent=1 // pred_check_branch
      %37 = sbr.rel (0) target = $region21
    $region20: #{tpu_custom_call.1} parent=1 // pred_region
      %38 = dma.done [#allocation6], 64
    $region21: #{tpu_custom_call.1} parent=1 // pred_fallthru
      _
    %v39 = vld [vmem:[#allocation2] sm:$0xf]
    %v40 = vld [vmem:[#allocation5] sm:$0xf]
    %v41 = vld [vmem:[%s2] sm:$0xf]
    %v42 = vsub.f32 %v39, %v40
    %v43 = vadd.f32 %v42, 1e-06
    %v44 = vmul.f32 %v43, %v43
    %v45 = vsub.f32 %v39, %v41
    %v46 = vadd.f32 %v45, 1e-06
    %v47 = vmul.f32 %v46, %v46
    %vm48 = vcmask 257024
    %v49 = vsel %vm48, %v44, 0.0
    %50 = vadd.xlane.f32.xlu0 %v49
    %v51 = vpop.xlane.xlu0 %50
    %v52 = vsel %vm48, %v47, 0.0
    %53 = vadd.xlane.f32.xlu0 %v52
    %v54 = vpop.xlane.xlu0 %53
    %v55 = vrsqrt.pop %v51
    %v56 = vmul.f32 %v51, %v55
    %vm57 = vcmp.eq.f32.partialorder %v51, inf
    %v58 = vsel %vm57, %v51, %v56
    %vm59 = vcmp.eq.f32.partialorder %v51, 0.0
    %v60 = vand.u32 %v51, 2147483648
    %v61 = vsel %vm59, %v60, %v58
    %v62 = vrsqrt.pop %v54
    %v63 = vmul.f32 %v54, %v62
    %vm64 = vcmp.eq.f32.partialorder %v54, inf
    %v65 = vsel %vm64, %v54, %v63
    %vm66 = vcmp.eq.f32.partialorder %v54, 0.0
    %v67 = vand.u32 %v54, 2147483648
    %v68 = vsel %vm66, %v67, %v65
    %v69 = vsub.f32 %v61, %v68
    %v70 = vadd.f32 %v69, 1.0
    %v71 = vmax.f32 %v70, 0.0
    %v72 = vadd.f32 %v71, 0.0
    %74 = vrot.lane.b32.xlu0 %v44, 96
    %v75 = vpop.permute.xlu0 %74
    %v77 = vsel %vm48, %v75, 0.0
    %78 = vadd.xlane.f32.xlu0 %v77
    %v79 = vpop.xlane.xlu0 %78
    %81 = vrot.lane.b32.xlu0 %v47, 96
    %v82 = vpop.permute.xlu0 %81
    %v84 = vsel %vm48, %v82, 0.0
    %85 = vadd.xlane.f32.xlu0 %v84
    %v86 = vpop.xlane.xlu0 %85
    %v87 = vrsqrt.pop %v79
    %v88 = vmul.f32 %v79, %v87
    %vm89 = vcmp.eq.f32.partialorder %v79, inf
    %v90 = vsel %vm89, %v79, %v88
    %vm91 = vcmp.eq.f32.partialorder %v79, 0.0
    %v92 = vand.u32 %v79, 2147483648
    %v93 = vsel %vm91, %v92, %v90
    %v94 = vrsqrt.pop %v86
    %v95 = vmul.f32 %v86, %v94
    %vm96 = vcmp.eq.f32.partialorder %v86, inf
    %v97 = vsel %vm96, %v86, %v95
    %vm98 = vcmp.eq.f32.partialorder %v86, 0.0
    %v99 = vand.u32 %v86, 2147483648
    %v100 = vsel %vm98, %v99, %v97
    %v101 = vsub.f32 %v93, %v100
    %v102 = vadd.f32 %v101, 1.0
    %v103 = vmax.f32 %v102, 0.0
    %v104 = vadd.f32 %v72, %v103
    %105 = vrot.lane.b32.xlu0 %v44, 64
    %v106 = vpop.permute.xlu0 %105
    %v108 = vsel %vm48, %v106, 0.0
    %109 = vadd.xlane.f32.xlu0 %v108
    %v110 = vpop.xlane.xlu0 %109
    %111 = vrot.lane.b32.xlu0 %v47, 64
    %v112 = vpop.permute.xlu0 %111
    %v114 = vsel %vm48, %v112, 0.0
    %115 = vadd.xlane.f32.xlu0 %v114
    %v116 = vpop.xlane.xlu0 %115
    %v117 = vrsqrt.pop %v110
    %v118 = vmul.f32 %v110, %v117
    %vm119 = vcmp.eq.f32.partialorder %v110, inf
    %v120 = vsel %vm119, %v110, %v118
    %vm121 = vcmp.eq.f32.partialorder %v110, 0.0
    %v122 = vand.u32 %v110, 2147483648
    %v123 = vsel %vm121, %v122, %v120
    %v124 = vrsqrt.pop %v116
    %v125 = vmul.f32 %v116, %v124
    %vm126 = vcmp.eq.f32.partialorder %v116, inf
    %v127 = vsel %vm126, %v116, %v125
    %vm128 = vcmp.eq.f32.partialorder %v116, 0.0
    %v129 = vand.u32 %v116, 2147483648
    %v130 = vsel %vm128, %v129, %v127
    %v131 = vsub.f32 %v123, %v130
    %v132 = vadd.f32 %v131, 1.0
    %v133 = vmax.f32 %v132, 0.0
    %v134 = vadd.f32 %v104, %v133
    %135 = vrot.lane.b32.xlu0 %v44, 32
    %v136 = vpop.permute.xlu0 %135
    %v138 = vsel %vm48, %v136, 0.0
    %139 = vadd.xlane.f32.xlu0 %v138
    %v140 = vpop.xlane.xlu0 %139
    %141 = vrot.lane.b32.xlu0 %v47, 32
    %v142 = vpop.permute.xlu0 %141
    %v144 = vsel %vm48, %v142, 0.0
    %145 = vadd.xlane.f32.xlu0 %v144
    %v146 = vpop.xlane.xlu0 %145
    %v147 = vrsqrt.pop %v140
    %v148 = vmul.f32 %v140, %v147
    %vm149 = vcmp.eq.f32.partialorder %v140, inf
    %v150 = vsel %vm149, %v140, %v148
    %vm151 = vcmp.eq.f32.partialorder %v140, 0.0
    %v152 = vand.u32 %v140, 2147483648
    %v153 = vsel %vm151, %v152, %v150
    %v154 = vrsqrt.pop %v146
    %v155 = vmul.f32 %v146, %v154
    %vm156 = vcmp.eq.f32.partialorder %v146, inf
    %v157 = vsel %vm156, %v146, %v155
    %vm158 = vcmp.eq.f32.partialorder %v146, 0.0
    %v159 = vand.u32 %v146, 2147483648
    %v160 = vsel %vm158, %v159, %v157
    %v161 = vsub.f32 %v153, %v160
    %v162 = vadd.f32 %v161, 1.0
    %v163 = vmax.f32 %v162, 0.0
    %v164 = vadd.f32 %v134, %v163
    %vm165 = vcmask 3072
    %v166 = vsel %vm165, %v164, 0.0
    %167 = vadd.xlane.f32.xlu0 %v166
    %v168 = vpop.xlane.xlu0 %167
    %v169 = vrot.slane %v168, 4
    %v170 = vadd.f32 %v168, %v169
    %v171 = vrot.slane %v170, 2
    %v172 = vadd.f32 %v170, %v171
    %v173 = vrot.slane %v172, 1
    %v174 = vadd.f32 %v172, %v173
    %s175 = vtos %v174
    %s176 = scalar_lea.smem [#allocation7], 0
    %177 = sst [smem:[%s176]] %s175
    // Predicated region
    $region22: #{tpu_custom_call.1} parent=1 // pred_check
      _
    $region23: #{tpu_custom_call.1} parent=1 // pred_check_branch
      %179 = sbr.rel (0) target = $region25
    $region24: #{tpu_custom_call.1} parent=1 // pred_region
      %s181 = ssub.s32 16, 16
      %182 = vsyncadd [#allocation4], %s181
      %185 = dma.smem_to_hbm [#allocation7], 16, %s3, [#allocation4]
    $region25: #{tpu_custom_call.1} parent=1 // pred_fallthru
      _
    // Predicated region
    $region26: #{tpu_custom_call.1} parent=1 // pred_check
      _
    $region27: #{tpu_custom_call.1} parent=1 // pred_check_branch
      %187 = sbr.rel (0) target = $region29
    $region28: #{tpu_custom_call.1} parent=1 // pred_region
      %188 = dma.done [#allocation4], 16
    $region29: #{tpu_custom_call.1} parent=1 // pred_fallthru
      _
    %189 = sfence
    %190 = vsyncpa [#allocation3], 1
    %191 = vsyncpa [#allocation6], 1
    %192 = vsyncpa [#allocation4], 1

</llo_original>
